<compile_context>
chip_gen: v7x
topology: tpu7x:2x2x1
jax: 0.10.0
libtpu: 0.0.40
codegen_flags: <defaults>
</compile_context>

<pallas_src>
import jax
import jax.numpy as jnp
from jax.experimental import pallas as pl
from jax.experimental.pallas import tpu as pltpu


def _copy_kernel(x_ref, o_ref):
    # Identity copy of one lane-dense tile of the flattened buffer.
    o_ref[...] = x_ref[...]


def pallas_view(x, size):
    """Equivalent of torch.Tensor.view(size) for a contiguous tensor."""
    total = int(x.size)
    itemsize = jnp.dtype(x.dtype).itemsize

    # Row-major flatten: pure metadata, identical element order to torch.
    flat = jnp.reshape(x, (total,))

    # Pad to a multiple of one (8, 128) tile so the 2-D presentation is always
    # legal and lane-dense (no masked partial stores for ragged sizes).
    min_block = 8 * 128
    padded_total = ((total + min_block - 1) // min_block) * min_block
    if padded_total != total:
        flat = jnp.pad(flat, (0, padded_total - total))

    # Lane-dense presentation: pick the widest last dim (multiple of 128)
    # that still leaves at least 8 rows.  Wide last dim => unmasked vst and
    # long contiguous DMA bursts (the biggest lever for a mem-bound copy).
    lane_w = 128
    for w in (2048, 1024, 512, 256):
        if padded_total % w == 0 and padded_total // w >= 8:
            lane_w = w
            break
    rows = padded_total // lane_w
    buf2d = jnp.reshape(flat, (rows, lane_w))

    # Tile the row dimension.  Cap the per-block footprint at ~2 MiB so the
    # default double-buffered pipeline (in + out) stays within v5e's 16 MiB
    # scoped VMEM and well inside v6e (32 MiB) / v7x (32 MiB scoped) budgets.
    max_block_bytes = 2 * 1024 * 1024
    tile_rows = max(8, (max_block_bytes // (lane_w * itemsize)) // 8 * 8)
    if tile_rows >= rows:
        tile_rows = rows  # full extent along rows: always a legal block shape
    grid = (pl.cdiv(rows, tile_rows),)

    copied = pl.pallas_call(
        _copy_kernel,
        out_shape=jax.ShapeDtypeStruct((rows, lane_w), x.dtype),
        grid=grid,
        in_specs=[pl.BlockSpec((tile_rows, lane_w), lambda i: (i, 0))],
        out_specs=pl.BlockSpec((tile_rows, lane_w), lambda i: (i, 0)),
        compiler_params=pltpu.CompilerParams(
            dimension_semantics=("parallel",)),
        cost_estimate=pl.CostEstimate(
            flops=0,
            transcendentals=0,
            bytes_accessed=2 * padded_total * itemsize),
    )(buf2d)

    # Drop padding and apply the final shape: pure metadata, same semantics
    # as torch .view(size) (supports -1 via jnp.reshape).
    out_flat = jnp.reshape(copied, (padded_total,))[:total]
    return jnp.reshape(out_flat, size)


class View:
    """Mirror of the PyTorch View module (no parameters)."""

    def __init__(self, size):
        self.size = size

    def __call__(self, tensor):
        return pallas_view(tensor, self.size)


if __name__ == "__main__":
    key = jax.random.PRNGKey(0)
    k1, k2 = jax.random.split(key)

    # Typical GMM-VAE use of View: flatten NCHW before a dense layer.
    x = jax.random.normal(k1, (2, 4, 16, 16), dtype=jnp.float32)
    view = View((2, 4 * 16 * 16))
    y = view(x)
    jax.block_until_ready(y)

    ref = jnp.reshape(x, (2, 4 * 16 * 16))
    assert y.shape == (2, 1024), y.shape
    assert y.dtype == x.dtype
    assert bool(jnp.array_equal(y, ref))

    # Ragged size (not a multiple of 8*128) exercises the padding path.
    x2 = jax.random.normal(k2, (3, 5, 7), dtype=jnp.float32)
    y2 = View((5, 21))(x2)
    jax.block_until_ready(y2)
    assert y2.shape == (5, 21), y2.shape
    assert bool(jnp.array_equal(y2, jnp.reshape(x2, (5, 21))))

    print("KERNEL_OK")
</pallas_src>

<mosaic_0001>
module attributes {stable_mosaic.version = 11 : i64} {
  func.func @_copy_kernel(%arg0: i32, %arg1: memref<8x256xf32, #tpu.memory_space<vmem>>, %arg2: memref<8x256xf32, #tpu.memory_space<vmem>>) attributes {dimension_semantics = [#tpu.dimension_semantics<parallel>], iteration_bounds = array<i64: 1>, scalar_prefetch = 0 : i64, scratch_operands = 0 : i64, tpu.core_type = #tpu.core_type<tc>, window_params = [{transform_indices = @transform_0, window_bounds = array<i64: 8, 256>}, {transform_indices = @transform_1, window_bounds = array<i64: 8, 256>}]} {
    %c0 = arith.constant 0 : index
    %c0_0 = arith.constant 0 : index
    %0 = vector.load %arg1[%c0, %c0_0] : memref<8x256xf32, #tpu.memory_space<vmem>>, vector<8x256xf32>
    %c0_1 = arith.constant 0 : index
    %c0_2 = arith.constant 0 : index
    %1 = vector.load %arg2[%c0_1, %c0_2] : memref<8x256xf32, #tpu.memory_space<vmem>>, vector<8x256xf32>
    tpu.vector_store %arg2[%c0_1, %c0_2], %0 {strides = array<i32>} : memref<8x256xf32, #tpu.memory_space<vmem>>, vector<8x256xf32>,
    return
  }
  func.func @transform_0(%arg0: i32) -> (i32, i32) {
    %c0_i32 = arith.constant 0 : i32
    %c0_i32_0 = arith.constant 0 : i32
    return %arg0, %c0_i32 : i32, i32
  }
  func.func @transform_1(%arg0: i32) -> (i32, i32) {
    %c0_i32 = arith.constant 0 : i32
    %c0_i32_0 = arith.constant 0 : i32
    return %arg0, %c0_i32 : i32, i32
  }
}

</mosaic_0001>

<llo_original>
// kernel: tpu_custom_call.1
$region0: #{tpu_custom_call.1}
  #allocation0 [shape = 'u32[]', space=smem, size = 0x4, offset = 0x4, fixed_abs, tag = 'smem constant byte address 0x4 - core index']
  #allocation1 [shape = 'u32[144,128]{1,0:T(1,128)}', space=vmem, size = 0x12000, scoped, tag = 'internal scratch']
  %s0 = inlined_call_operand.hbm [shape: f32[8,256], index: 0, kind: input, shape index: {}]
  %s1 = inlined_call_operand.hbm [shape: f32[8,256], index: 1, kind: output, shape index: {}]
  %s2 = sld [smem:[#allocation0]]
  $region18: #{tpu_custom_call.1} parent=0
    _
  %s4 = ssub.s32 1, %s2
  %s5 = scalar_select 0, %s4, %s2
  $region1: #{tpu_custom_call.1} parent=0
    #allocation2 [shape = 'u8[8192]{0}', space=vmem, size = 0x2000, scoped, tag = 'input window, operand 0, single buffered']
    #allocation3 [shape = 's32[1]{0}', space=sflag, size = 0x4, scoped, tag = 'scoped memory for tpu_custom_call.1']
    #allocation4 [shape = 's32[1]{0}', space=sflag, size = 0x4, scoped, tag = 'scoped memory for tpu_custom_call.1']
    #allocation5 [shape = 'u8[8192]{0}', space=vmem, size = 0x2000, scoped, tag = 'output window, operand 0, single buffered']
    %6 = vsyncpa [#allocation3], 0
    %7 = vsyncpa [#allocation4], 0
    // Predicated region
    $region2: #{tpu_custom_call.1} parent=1 // pred_check
      _
    $region3: #{tpu_custom_call.1} parent=1 // pred_check_branch
      %9 = sbr.rel (0) target = $region5
    $region4: #{tpu_custom_call.1} parent=1 // pred_region
      %s11 = ssub.s32 256, 256
      %12 = vsyncadd [#allocation3], %s11
      %s14 = sshll.u32 [#allocation2], 4
      %s15 = int_to_ptr.vmem [resolvable:$true] %s14
      %17 = dma.hbm_to_vmem [thread:$0]  %s0, 256, %s15, [#allocation3]
    $region5: #{tpu_custom_call.1} parent=1 // pred_fallthru
      _
    // Predicated region
    $region6: #{tpu_custom_call.1} parent=1 // pred_check
      _
    $region7: #{tpu_custom_call.1} parent=1 // pred_check_branch
      %19 = sbr.rel (0) target = $region9
    $region8: #{tpu_custom_call.1} parent=1 // pred_region
      %20 = dma.done [#allocation3], 256
    $region9: #{tpu_custom_call.1} parent=1 // pred_fallthru
      _
    %v21 = vld [vmem:[#allocation2] sm:$0xff]
    %v22 = vld [vmem:[#allocation2 + $0x8] sm:$0xff]
    %23 = vst [vmem:[#allocation5] sm:$0xff] %v21
    %24 = vst [vmem:[#allocation5 + $0x8] sm:$0xff] %v22
    // Predicated region
    $region10: #{tpu_custom_call.1} parent=1 // pred_check
      _
    $region11: #{tpu_custom_call.1} parent=1 // pred_check_branch
      %26 = sbr.rel (0) target = $region13
    $region12: #{tpu_custom_call.1} parent=1 // pred_region
      %s28 = ssub.s32 256, 256
      %29 = vsyncadd [#allocation4], %s28
      %s31 = sshll.u32 [#allocation5], 4
      %s32 = int_to_ptr.vmem [resolvable:$true] %s31
      %34 = dma.vmem_to_hbm [thread:$0]  %s32, 256, %s1, [#allocation4]
    $region13: #{tpu_custom_call.1} parent=1 // pred_fallthru
      _
    // Predicated region
    $region14: #{tpu_custom_call.1} parent=1 // pred_check
      _
    $region15: #{tpu_custom_call.1} parent=1 // pred_check_branch
      %36 = sbr.rel (0) target = $region17
    $region16: #{tpu_custom_call.1} parent=1 // pred_region
      %37 = dma.done [#allocation4], 256
    $region17: #{tpu_custom_call.1} parent=1 // pred_fallthru
      _
    %38 = vsyncpa [#allocation3], 1
    %39 = vsyncpa [#allocation4], 1

</llo_original>
